<compile_context>
chip_gen: v7x
topology: tpu7x:2x2x1
jax: 0.10.0
libtpu: 0.0.40
codegen_flags: <defaults>
</compile_context>

<pallas_src>
import functools

import jax
import jax.numpy as jnp
from jax.experimental import pallas as pl
from jax.experimental.pallas import tpu as pltpu


def _logitnorm_ce_kernel(y_ref, labels_ref, loss_ref, *, t):
    # y_ref:      (TILE_N, C) float    in VMEM
    # labels_ref: (TILE_N, 1) int32    in VMEM
    # loss_ref:   (TILE_N, 1) float32  per-row CE loss
    logits = y_ref[...].astype(jnp.float32)                       # (TN, C)
    labels = labels_ref[...]                                      # (TN, 1)

    # L2 norm along classes (+eps); temperature folded into a single scale.
    sq_sum = jnp.sum(logits * logits, axis=-1, keepdims=True)     # (TN, 1)
    norms = jnp.sqrt(sq_sum) + 1e-7
    inv_scale = 1.0 / (norms * jnp.float32(t))                    # exact, (TN,1)
    z = logits * inv_scale                                        # (TN, C)

    # Numerically stable log-sum-exp over classes.
    m = jnp.max(z, axis=-1, keepdims=True)                        # (TN, 1)
    lse = m + jnp.log(jnp.sum(jnp.exp(z - m), axis=-1, keepdims=True))

    # Label logit: compare + select + reduce (no one-hot float mask).
    cols = jax.lax.broadcasted_iota(jnp.int32, z.shape, 1)        # (TN, C)
    z_label = jnp.sum(jnp.where(cols == labels, z, 0.0),
                      axis=-1, keepdims=True)                     # (TN, 1)

    loss_ref[...] = lse - z_label                                 # (TN, 1)


def _round_up(x, m):
    return (x + m - 1) // m * m


def _pick_tile_n(n, c):
    # Roughly 6 live f32 (TILE_N, C) tensors in flight (double-buffered input
    # + z / exp / where intermediates). Keep comfortably inside v7x's 64 MiB
    # per-core VMEM; cap at 512 rows (per-step overhead already amortized).
    budget = 12 * 1024 * 1024
    per_row_bytes = 6 * c * 4
    tile = max(8, min(budget // max(per_row_bytes, 1), 512))
    tile = (tile // 8) * 8
    return min(tile, _round_up(n, 8))


def logitnorm_loss(x, y, labels, t=1.0, tile_n=None):
    """Pallas TPU implementation of LogitNormLoss.forward."""
    del x  # unused by the loss path, mirrors the PyTorch forward signature
    if labels is None:
        # PyTorch branch: return (logits, 0) untouched — no kernel needed.
        return y, 0

    n, c = y.shape
    if tile_n is None:
        tile_n = _pick_tile_n(n, c)
    tile_n = max(8, (tile_n // 8) * 8)

    labels2d = labels.astype(jnp.int32).reshape(n, 1)

    # Pad the batch dim up to a multiple of 8 (f32 sublane) if needed so the
    # block shape is always legal; padded rows are sliced off before the mean.
    n_pad = _round_up(n, 8)
    if n_pad != n:
        y = jnp.pad(y, ((0, n_pad - n), (0, 0)))
        labels2d = jnp.pad(labels2d, ((0, n_pad - n), (0, 0)))
    tile_n = min(tile_n, n_pad)

    grid = (pl.cdiv(n_pad, tile_n),)
    kernel = functools.partial(_logitnorm_ce_kernel, t=float(t))

    # Explicit scoped-VMEM limit: above v5e's 16 MiB default, below v7x's
    # 64 MiB physical per-core VMEM.
    vmem_limit = int(min(max(8 * tile_n * c * 4, 4 << 20), 48 << 20))

    per_row_loss = pl.pallas_call(
        kernel,
        out_shape=jax.ShapeDtypeStruct((n_pad, 1), jnp.float32),
        grid_spec=pltpu.PrefetchScalarGridSpec(
            num_scalar_prefetch=0,
            grid=grid,
            in_specs=[
                pl.BlockSpec((tile_n, c), lambda i: (i, 0)),
                pl.BlockSpec((tile_n, 1), lambda i: (i, 0)),
            ],
            out_specs=pl.BlockSpec((tile_n, 1), lambda i: (i, 0)),
        ),
        compiler_params=pltpu.CompilerParams(
            dimension_semantics=("parallel",),
            vmem_limit_bytes=vmem_limit,
        ),
    )(y, labels2d)

    # Tiny final reduction (mean over N scalars) in the wrapper.
    return jnp.sum(per_row_loss[:n, 0]) / jnp.float32(n)


def _reference(y, labels, t=1.0):
    # Pure-JAX reference for sanity checking.
    norms = jnp.sqrt(jnp.sum(y * y, axis=-1, keepdims=True)) + 1e-7
    z = (y / norms) / t
    logp = jax.nn.log_softmax(z, axis=-1)
    return -jnp.mean(jnp.take_along_axis(logp, labels[:, None], axis=-1))


if __name__ == "__main__":
    key = jax.random.PRNGKey(0)
    k1, k2, k3 = jax.random.split(key, 3)

    # Small but lane-dense demo shape: batch=40 (3 tiles of 16, last partial),
    # classes=128 so C fills the 128-lane vreg dimension.
    N, C = 40, 128
    T = 0.7
    x = jax.random.normal(k1, (N, C), dtype=jnp.float32)   # unused by the loss
    y = jax.random.normal(k2, (N, C), dtype=jnp.float32)   # logits
    labels = jax.random.randint(k3, (N,), 0, C, dtype=jnp.int32)

    loss = logitnorm_loss(x, y, labels, t=T, tile_n=16)
    loss = jax.block_until_ready(loss)

    ref = _reference(y, labels, t=T)
    assert jnp.allclose(loss, ref, atol=1e-5, rtol=1e-5), (loss, ref)

    # labels is None branch: passthrough, no kernel.
    out_logits, zero = logitnorm_loss(x, y, None, t=T)
    assert zero == 0 and out_logits.shape == y.shape

    print("KERNEL_OK")
</pallas_src>

<mosaic_0001>
module attributes {stable_mosaic.version = 11 : i64} {
  func.func @_logitnorm_ce_kernel(%arg0: i32, %arg1: memref<16x128xf32, #tpu.memory_space<vmem>>, %arg2: memref<16x1xi32, #tpu.memory_space<vmem>>, %arg3: memref<16x1xf32, #tpu.memory_space<vmem>>) attributes {dimension_semantics = [#tpu.dimension_semantics<parallel>], iteration_bounds = array<i64: 3>, scalar_prefetch = 0 : i64, scratch_operands = 0 : i64, tpu.core_type = #tpu.core_type<tc>, window_params = [{transform_indices = @transform_0, window_bounds = array<i64: 16, 128>}, {transform_indices = @transform_1, window_bounds = array<i64: 16, 1>}, {transform_indices = @transform_2, window_bounds = array<i64: 16, 1>}]} {
    %c0 = arith.constant 0 : index
    %c0_0 = arith.constant 0 : index
    %0 = vector.load %arg1[%c0, %c0_0] : memref<16x128xf32, #tpu.memory_space<vmem>>, vector<16x128xf32>
    %c0_1 = arith.constant 0 : index
    %c0_2 = arith.constant 0 : index
    %1 = vector.load %arg2[%c0_1, %c0_2] : memref<16x1xi32, #tpu.memory_space<vmem>>, vector<16x1xi32>
    %2 = arith.mulf %0, %0 : vector<16x128xf32>
    %cst = arith.constant dense<0.000000e+00> : vector<16xf32>
    %3 = vector.multi_reduction <add>, %2, %cst [1] : vector<16x128xf32> to vector<16xf32>
    %4 = vector.shape_cast %3 : vector<16xf32> to vector<16x1xf32>
    %5 = math.sqrt %4 : vector<16x1xf32>
    %cst_3 = arith.constant 1.000000e-07 : f32
    %6 = vector.broadcast %cst_3 : f32 to vector<16x1xf32>
    %7 = arith.addf %5, %6 : vector<16x1xf32>
    %cst_4 = arith.constant 0.699999988 : f32
    %8 = vector.broadcast %cst_4 : f32 to vector<16x1xf32>
    %9 = arith.mulf %7, %8 : vector<16x1xf32>
    %cst_5 = arith.constant 1.000000e+00 : f32
    %10 = vector.broadcast %cst_5 : f32 to vector<16x1xf32>
    %11 = arith.divf %10, %9 : vector<16x1xf32>
    %12 = vector.broadcast %11 : vector<16x1xf32> to vector<16x128xf32>
    %13 = arith.mulf %0, %12 : vector<16x128xf32>
    %cst_6 = arith.constant dense<0xFF800000> : vector<16xf32>
    %14 = vector.multi_reduction <maximumf>, %13, %cst_6 [1] : vector<16x128xf32> to vector<16xf32>
    %15 = vector.shape_cast %14 : vector<16xf32> to vector<16x1xf32>
    %16 = vector.broadcast %15 : vector<16x1xf32> to vector<16x128xf32>
    %17 = arith.subf %13, %16 : vector<16x128xf32>
    %18 = math.exp %17 : vector<16x128xf32>
    %cst_7 = arith.constant dense<0.000000e+00> : vector<16xf32>
    %19 = vector.multi_reduction <add>, %18, %cst_7 [1] : vector<16x128xf32> to vector<16xf32>
    %20 = vector.shape_cast %19 : vector<16xf32> to vector<16x1xf32>
    %21 = math.log %20 : vector<16x1xf32>
    %22 = arith.addf %15, %21 : vector<16x1xf32>
    %23 = tpu.iota {dimensions = array<i32: 1>} : vector<16x128xi32>
    %24 = vector.broadcast %1 : vector<16x1xi32> to vector<16x128xi32>
    %25 = arith.cmpi eq, %23, %24 : vector<16x128xi32>
    %cst_8 = arith.constant 0.000000e+00 : f32
    %26 = vector.broadcast %cst_8 : f32 to vector<16x128xf32>
    %27 = arith.select %25, %13, %26 : vector<16x128xi1>, vector<16x128xf32>
    %cst_9 = arith.constant dense<0.000000e+00> : vector<16xf32>
    %28 = vector.multi_reduction <add>, %27, %cst_9 [1] : vector<16x128xf32> to vector<16xf32>
    %29 = vector.shape_cast %28 : vector<16xf32> to vector<16x1xf32>
    %30 = arith.subf %22, %29 : vector<16x1xf32>
    %c0_10 = arith.constant 0 : index
    %c0_11 = arith.constant 0 : index
    %31 = vector.load %arg3[%c0_10, %c0_11] : memref<16x1xf32, #tpu.memory_space<vmem>>, vector<16x1xf32>
    tpu.vector_store %arg3[%c0_10, %c0_11], %30 {strides = array<i32>} : memref<16x1xf32, #tpu.memory_space<vmem>>, vector<16x1xf32>,
    return
  }
  func.func @transform_0(%arg0: i32) -> (i32, i32) {
    %c0_i32 = arith.constant 0 : i32
    %c0_i32_0 = arith.constant 0 : i32
    return %arg0, %c0_i32 : i32, i32
  }
  func.func @transform_1(%arg0: i32) -> (i32, i32) {
    %c0_i32 = arith.constant 0 : i32
    %c0_i32_0 = arith.constant 0 : i32
    return %arg0, %c0_i32 : i32, i32
  }
  func.func @transform_2(%arg0: i32) -> (i32, i32) {
    %c0_i32 = arith.constant 0 : i32
    %c0_i32_0 = arith.constant 0 : i32
    return %arg0, %c0_i32 : i32, i32
  }
}

</mosaic_0001>

<llo_original>
// kernel: tpu_custom_call.1
$region0: #{tpu_custom_call.1}
  #allocation0 [shape = 'u32[]', space=smem, size = 0x4, offset = 0x4, fixed_abs, tag = 'smem constant byte address 0x4 - core index']
  #allocation1 [shape = 'u32[144,128]{1,0:T(1,128)}', space=vmem, size = 0x12000, scoped, tag = 'internal scratch']
  %s0 = inlined_call_operand.vmem [shape: f32[40,128], index: 0, kind: input, shape index: {}]
  %s1 = inlined_call_operand.vmem [shape: s32[40,1], index: 1, kind: input, shape index: {}]
  %s2 = inlined_call_operand.vmem [shape: f32[40,1], index: 2, kind: output, shape index: {}]
  %s3 = sld [smem:[#allocation0]]
  $region89: #{tpu_custom_call.1} parent=0
    _
  %s5 = ssub.s32 1, %s3
  %s6 = scalar_select 0, %s5, %s3
  $region1: #{tpu_custom_call.1} parent=0
    #allocation2 [shape = 'u8[16384]{0}', space=vmem, size = 0x4000, scoped, tag = 'output window, operand 0']
    loop: start=0, step=1, limit=5
    $region2: #{tpu_custom_call.1} parent=1 // loop_pre_header
      _
    $region3: #{tpu_custom_call.1} parent=1 // loop_header
      %s8 = sphi 0, %s12
      %p9 = scmp.ge.s32.totalorder %s8, 5
      %s18 = sphi 0, %s20
      %s21 = sphi 0, %s18
      %s22 = sphi 0, %s21
      %s38 = sphi 0, %s22
      %s44 = sphi 0, %s46
      %s47 = sphi 0, %s44
      %s48 = sphi 0, %s47
      %s64 = sphi 0, %s48
      %s70 = sphi 0, %s72
      %s73 = sphi 0, %s70
      %s74 = sphi 0, %s73
      %s90 = sphi 0, %s74
    $region4: #{tpu_custom_call.1} parent=1 // loop_header_branch
      %11 = sbr.rel (%p9) target = $region8
    $region5: #{tpu_custom_call.1} parent=1 // loop_body
      %s13 = ssub.s32 %s8, 1
      %s14 = ssub.s32 %s8, 2
      %s15 = sadd.s32 %s8, 1
      %s16 = ssub.s32 %s8, %s15
      %p17 = scmp.eq.s32.totalorder %s16, 0
      %s19 = sadd.s32 %s18, 1
      %s20 = scalar_select %p17, %s18, %s19
      %p23 = pneg %p17
      %p24 = scmp.eq.s32.totalorder %s8, 2
      %p25 = por %p23, %p24
      %p26 = scmp.ne.s32.totalorder %s18, %s21
      %p27 = scmp.eq.s32.totalorder %s8, 0
      %p28 = por %p26, %p27
      %p29 = scmp.ne.s32.totalorder %s18, %s21
      %p30 = scmp.eq.s32.totalorder %s13, 2
      %p31 = por %p29, %p30
      %p32 = scmp.ne.s32.totalorder %s21, %s22
      %p33 = scmp.eq.s32.totalorder %s13, 0
      %p34 = por %p32, %p33
      %p35 = scmp.ne.s32.totalorder %s21, %s22
      %p36 = scmp.eq.s32.totalorder %s14, 2
      %p37 = por %p35, %p36
      %p39 = scmp.ne.s32.totalorder %s22, %s38
      %p40 = scmp.eq.s32.totalorder %s14, 0
      %p41 = por %p39, %p40
      %s42 = ssub.s32 %s8, %s15
      %p43 = scmp.eq.s32.totalorder %s42, 0
      %s45 = sadd.s32 %s44, 1
      %s46 = scalar_select %p43, %s44, %s45
      %p49 = pneg %p43
      %p50 = scmp.eq.s32.totalorder %s8, 2
      %p51 = por %p49, %p50
      %p52 = scmp.ne.s32.totalorder %s44, %s47
      %p53 = scmp.eq.s32.totalorder %s8, 0
      %p54 = por %p52, %p53
      %p55 = scmp.ne.s32.totalorder %s44, %s47
      %p56 = scmp.eq.s32.totalorder %s13, 2
      %p57 = por %p55, %p56
      %p58 = scmp.ne.s32.totalorder %s47, %s48
      %p59 = scmp.eq.s32.totalorder %s13, 0
      %p60 = por %p58, %p59
      %p61 = scmp.ne.s32.totalorder %s47, %s48
      %p62 = scmp.eq.s32.totalorder %s14, 2
      %p63 = por %p61, %p62
      %p65 = scmp.ne.s32.totalorder %s48, %s64
      %p66 = scmp.eq.s32.totalorder %s14, 0
      %p67 = por %p65, %p66
      %s68 = ssub.s32 %s8, %s15
      %p69 = scmp.eq.s32.totalorder %s68, 0
      %s71 = sadd.s32 %s70, 1
      %s72 = scalar_select %p69, %s70, %s71
      %p75 = pneg %p69
      %p76 = scmp.eq.s32.totalorder %s8, 2
      %p77 = por %p75, %p76
      %p78 = scmp.ne.s32.totalorder %s70, %s73
      %p79 = scmp.eq.s32.totalorder %s8, 0
      %p80 = por %p78, %p79
      %p81 = scmp.ne.s32.totalorder %s70, %s73
      %p82 = scmp.eq.s32.totalorder %s13, 2
      %p83 = por %p81, %p82
      %p84 = scmp.ne.s32.totalorder %s73, %s74
      %p85 = scmp.eq.s32.totalorder %s13, 0
      %p86 = por %p84, %p85
      %p87 = scmp.ne.s32.totalorder %s73, %s74
      %p88 = scmp.eq.s32.totalorder %s14, 2
      %p89 = por %p87, %p88
      %p91 = scmp.ne.s32.totalorder %s74, %s90
      %p92 = scmp.eq.s32.totalorder %s14, 0
      %p93 = por %p91, %p92
      %p94 = scmp.le.s32.totalorder 1, %s8
      %p95 = scmp.lt.s32.totalorder %s8, 4
      %p96 = pnand %p94, %p95
      %p97 = pneg %p96
      // Predicated region
      $region9: #{tpu_custom_call.1} parent=5 // pred_check
        _
      $region10: #{tpu_custom_call.1} parent=5 // pred_check_branch
        %99 = sbr.rel (%p96) target = $region12
      $region11: #{tpu_custom_call.1} parent=5 // pred_region
        %s100 = ssub.s32 %s8, 1
      $region12: #{tpu_custom_call.1} parent=5 // pred_fallthru
        _
      %p101 = scmp.lt.s32.totalorder %s8, 3
      // Predicated region
      $region13: #{tpu_custom_call.1} parent=5 // pred_check
        %p102 = pneg %p101
      $region14: #{tpu_custom_call.1} parent=5 // pred_check_branch
        %104 = sbr.rel (%p102) target = $region16
      $region15: #{tpu_custom_call.1} parent=5 // pred_region
        // Predicated region
        $region17: #{tpu_custom_call.1} parent=15 // pred_check
          %p105 = pneg %p28
        $region18: #{tpu_custom_call.1} parent=15 // pred_check_branch
          %107 = sbr.rel (%p105) target = $region20
        $region19: #{tpu_custom_call.1} parent=15 // pred_region
          %s108 = smul.u32 2, %s8
          %s109 = ssub.s32 5, %s108
          %p110 = scmp.lt.s32.totalorder %s109, 2
          %s111 = scalar_select %p110, %s109, 2
          %s112 = smul.u32 128, %s111
          %p113 = scmp.lt.s32.totalorder %s108, 4
          %s114 = scalar_select %p113, %s108, 4
          %s115 = smul.addr %s114, 8
          %s116 = scalar_lea.vmem %s0, %s115
          %s117 = smul.u32 2, %s8
          %s118 = ssub.s32 5, %s117
          %p119 = scmp.lt.s32.totalorder %s118, 2
          %s120 = scalar_select %p119, %s118, 2
          %s121 = smul.u32 128, %s120
        $region20: #{tpu_custom_call.1} parent=15 // pred_fallthru
          _
        // Predicated region
        $region21: #{tpu_custom_call.1} parent=15 // pred_check
          %p122 = pneg %p54
        $region22: #{tpu_custom_call.1} parent=15 // pred_check_branch
          %124 = sbr.rel (%p122) target = $region24
        $region23: #{tpu_custom_call.1} parent=15 // pred_region
          %s125 = smul.u32 2, %s8
          %s126 = ssub.s32 5, %s125
          %p127 = scmp.lt.s32.totalorder %s126, 2
          %s128 = scalar_select %p127, %s126, 2
          %s129 = smul.u32 128, %s128
          %p130 = scmp.lt.s32.totalorder %s125, 4
          %s131 = scalar_select %p130, %s125, 4
          %s132 = smul.addr %s131, 8
          %s133 = scalar_lea.vmem %s1, %s132
          %s134 = smul.u32 2, %s8
          %s135 = ssub.s32 5, %s134
          %p136 = scmp.lt.s32.totalorder %s135, 2
          %s137 = scalar_select %p136, %s135, 2
          %s138 = smul.u32 128, %s137
        $region24: #{tpu_custom_call.1} parent=15 // pred_fallthru
          _
      $region16: #{tpu_custom_call.1} parent=5 // pred_fallthru
        _
      %p139 = scmp.le.s32.totalorder 1, %s8
      %p140 = scmp.lt.s32.totalorder %s8, 4
      %p141 = pnand %p139, %p140
      %p142 = pneg %p141
      // Predicated region
      $region25: #{tpu_custom_call.1} parent=5 // pred_check
        _
      $region26: #{tpu_custom_call.1} parent=5 // pred_check_branch
        %144 = sbr.rel (%p141) target = $region28
      $region27: #{tpu_custom_call.1} parent=5 // pred_region
        %s145 = ssub.s32 %s8, 1
        %s146 = smul.u32 2, %s13
        %s147 = ssub.s32 5, %s146
        %p148 = scmp.lt.s32.totalorder %s147, 2
        %s149 = scalar_select %p148, %s147, 2
        %s150 = smul.u32 128, %s149
        %p151 = scmp.lt.s32.totalorder %s146, 4
        %s152 = scalar_select %p151, %s146, 4
        %s153 = smul.addr %s152, 8
        %s154 = scalar_lea.vmem %s0, %s153
        %p155 = pneg %p34
        %p156 = pneg %p31
        %s157 = smul.u32 2, %s13
        %s158 = ssub.s32 5, %s157
        %p159 = scmp.lt.s32.totalorder %s158, 2
        %s160 = scalar_select %p159, %s158, 2
        %s161 = smul.u32 128, %s160
        %p162 = scmp.lt.s32.totalorder %s157, 4
        %s163 = scalar_select %p162, %s157, 4
        %s164 = smul.addr %s163, 8
        %s165 = scalar_lea.vmem %s1, %s164
        %p166 = pneg %p60
        %p167 = pneg %p57
        %p168 = pneg %p86
        %p169 = pneg %p83
        %s170 = sand.u32 %s73, 1
        %s171 = sand.u32 %s73, 1
        %s172 = smul.addr %s171, 16
        %s173 = scalar_lea.vmem [#allocation2], %s172
        %s174 = smul.u32 2, %s13
        %s175 = ssub.s32 5, %s174
        %p176 = scmp.lt.s32.totalorder %s175, 2
        %s177 = scalar_select %p176, %s175, 2
        %s178 = smul.u32 128, %s177
        %p179 = scmp.lt.s32.totalorder %s174, 4
        %s180 = scalar_select %p179, %s174, 4
        %s181 = smul.addr %s180, 8
        %s182 = scalar_lea.vmem %s0, %s181
        %s183 = smul.u32 2, %s13
        %s184 = ssub.s32 5, %s183
        %p185 = scmp.lt.s32.totalorder %s184, 2
        %s186 = scalar_select %p185, %s184, 2
        %s187 = smul.u32 128, %s186
        %s188 = smul.u32 2, %s13
        %s189 = ssub.s32 5, %s188
        %p190 = scmp.lt.s32.totalorder %s189, 2
        %s191 = scalar_select %p190, %s189, 2
        %s192 = smul.u32 128, %s191
        %p193 = scmp.lt.s32.totalorder %s188, 4
        %s194 = scalar_select %p193, %s188, 4
        %s195 = smul.addr %s194, 8
        %s196 = scalar_lea.vmem %s1, %s195
        %s197 = smul.u32 2, %s13
        %s198 = ssub.s32 5, %s197
        %p199 = scmp.lt.s32.totalorder %s198, 2
        %s200 = scalar_select %p199, %s198, 2
        %s201 = smul.u32 128, %s200
        %s202 = smul.u32 2, %s13
        %s203 = ssub.s32 5, %s202
        %p204 = scmp.lt.s32.totalorder %s203, 2
        %s205 = scalar_select %p204, %s203, 2
        %s206 = smul.u32 128, %s205
        %v207 = vld [vmem:[%s182] sm:$0xff]
        %v208 = vld [vmem:[%s182 + $0x8] sm:$0xff]
        %v209 = vld [vmem:[%s196] sm:$0xff]
        %v210 = vld [vmem:[%s196 + $0x8] sm:$0xff]
        %v211 = vmul.f32 %v207, %v207
        %v212 = vmul.f32 %v208, %v208
        %213 = vadd.xlane.f32.xlu0 %v211
        %v214 = vpop.xlane.xlu0 %213
        %215 = vadd.xlane.f32.xlu0 %v212
        %v216 = vpop.xlane.xlu0 %215
        %v217 = vrsqrt.pop %v214
        %v218 = vmul.f32 %v214, %v217
        %vm219 = vcmp.eq.f32.partialorder %v214, inf
        %v220 = vsel %vm219, %v214, %v218
        %vm221 = vcmp.eq.f32.partialorder %v214, 0.0
        %v222 = vand.u32 %v214, 2147483648
        %v223 = vsel %vm221, %v222, %v220
        %v224 = vrsqrt.pop %v216
        %v225 = vmul.f32 %v216, %v224
        %vm226 = vcmp.eq.f32.partialorder %v216, inf
        %v227 = vsel %vm226, %v216, %v225
        %vm228 = vcmp.eq.f32.partialorder %v216, 0.0
        %v229 = vand.u32 %v216, 2147483648
        %v230 = vsel %vm228, %v229, %v227
        %v231 = vadd.f32 %v223, 1e-07
        %v232 = vadd.f32 %v230, 1e-07
        %v233 = vmul.f32 %v231, 0.7
        %v234 = vmul.f32 %v232, 0.7
        %v235 = vrcp.pop %v233
        %v236 = vmul.f32 1.0, %v235
        %v237 = vrcp.pop %v234
        %v238 = vmul.f32 1.0, %v237
        %v239 = vmul.f32 %v207, %v236
        %v240 = vmul.f32 %v208, %v238
        %241 = vmax.xlane.f32.xlu0 %v239
        %v242 = vpop.xlane.xlu0 %241
        %243 = vmax.xlane.f32.xlu0 %v240
        %v244 = vpop.xlane.xlu0 %243
        %v245 = vsub.f32 %v239, %v242
        %v246 = vsub.f32 %v240, %v244
        %v247 = vmul.f32 %v245, 1.442695
        %v248 = vpow.pop %v247
        %v249 = vmul.f32 %v246, 1.442695
        %v250 = vpow.pop %v249
        %251 = vadd.xlane.f32.xlu0 %v248
        %v252 = vpop.xlane.xlu0 %251
        %253 = vadd.xlane.f32.xlu0 %v250
        %v254 = vpop.xlane.xlu0 %253
        %v255 = vlog2.pop %v252
        %v256 = vmul.f32 %v255, 0.6931472
        %v257 = vlog2.pop %v254
        %v258 = vmul.f32 %v257, 0.6931472
        %v259 = vadd.f32 %v242, %v256
        %v260 = vadd.f32 %v244, %v258
        %v261 = vlaneseq
        %v262 = vand.u32 %v261, 127
        %263 = vset.pattern.permute.xlu0 0
        %264 = vperm.xlu0 %263, %v209
        %v265 = vpop.permute.xlu0 %264
        %266 = vset.pattern.permute.xlu0 0
        %267 = vperm.xlu0 %266, %v210
        %v268 = vpop.permute.xlu0 %267
        %vm269 = vcmp.eq.s32.totalorder %v262, %v265
        %vm270 = vcmp.eq.s32.totalorder %v262, %v268
        %v271 = vsel %vm269, %v239, 0.0
        %v272 = vsel %vm270, %v240, 0.0
        %273 = vadd.xlane.f32.xlu0 %v271
        %v274 = vpop.xlane.xlu0 %273
        %275 = vadd.xlane.f32.xlu0 %v272
        %v276 = vpop.xlane.xlu0 %275
        %v277 = vsub.f32 %v259, %v274
        %v278 = vsub.f32 %v260, %v276
        %vm279 = vcmask 7168
        %280 = vst.msk [vmem:[%s173] sm:$0xff] %vm279, %v277
        %281 = vst.msk [vmem:[%s173 + $0x8] sm:$0xff] %vm279, %v278
        %s282 = sand.u32 %s73, 1
        %s283 = sand.u32 %s73, 1
        %s284 = smul.addr %s283, 16
        %s285 = scalar_lea.vmem [#allocation2], %s284
        // Predicated region
        $region29: #{tpu_custom_call.1} parent=27 // pred_check
          %p286 = pneg %p83
        $region30: #{tpu_custom_call.1} parent=27 // pred_check_branch
          %288 = sbr.rel (%p286) target = $region32
        $region31: #{tpu_custom_call.1} parent=27 // pred_region
          %s289 = smul.u32 2, %s13
          %s290 = ssub.s32 5, %s289
          %p291 = scmp.lt.s32.totalorder %s290, 2
          %s292 = scalar_select %p291, %s290, 2
          %s293 = smul.u32 128, %s292
          %p294 = scmp.ne.s32.totalorder 0, %s293
          %s295 = smul.addr %s289, 8
          %s296 = scalar_lea.vmem %s2, %s295
          // Predicated region
          $region33: #{tpu_custom_call.1} parent=31 // pred_check
            %p297 = pneg %p294
          $region34: #{tpu_custom_call.1} parent=31 // pred_check_branch
            %299 = sbr.rel (%p297) target = $region36
          $region35: #{tpu_custom_call.1} parent=31 // pred_region
            // Predicated region
            $region37: #{tpu_custom_call.1} parent=35 // pred_check
              _
            $region38: #{tpu_custom_call.1} parent=35 // pred_check_branch
              %301 = sbr.rel (0) target = $region40
            $region39: #{tpu_custom_call.1} parent=35 // pred_region
              // Predicated region
              $region59: #{tpu_custom_call.1} parent=39 // pred_check
                _
              $region60: #{tpu_custom_call.1} parent=39 // pred_check_branch
                %352 = sbr.rel (0) target = $region62
              $region61: #{tpu_custom_call.1} parent=39 // pred_region
                %s353 = sshrl.u32 %s292, 1
                // While loop
                $region63: #{tpu_custom_call.1} parent=61 // loop_pre_header
                  _
                $region64: #{tpu_custom_call.1} parent=61 // loop_header
                  %s355 = sphi 0, %s357
                  %p356 = scmp.ge.s32.totalorder %s355, %s353
                  %s360 = sphi 0, %s369
                  %s361 = sphi %s285, %s372
                  %s362 = sphi %s296, %s373
                $region65: #{tpu_custom_call.1} parent=61 // loop_header_branch
                  %359 = sbr.rel (%p356) target = $region69
                $region66: #{tpu_custom_call.1} parent=61 // loop_body
                  %v363 = vld [vmem:[%s361] sm:$0xff]
                  %364 = vst [vmem:[%s362] sm:$0xff] %v363
                  %v365 = vld [vmem:[%s361 + $0x8] sm:$0xff]
                  %366 = vst [vmem:[%s362 + $0x8] sm:$0xff] %v365
                  %s367 = sadd.s32 1, %s360
                  %p368 = scmp.ge.s32.totalorder %s367, %s353
                  %s369 = scalar_select %p368, 0, %s367
                  %s370 = smul.u32 %s369, 16
                  %s371 = smul.u32 %s369, 16
                  %s372 = scalar_lea.vmem %s285, %s370 [#allocation2]
                  %s373 = scalar_lea.vmem %s296, %s371
                $region67: #{tpu_custom_call.1} parent=61 // loop_footer
                  %s357 = sadd.s32 %s355, 1
                $region68: #{tpu_custom_call.1} parent=61 // loop_footer_branch
                  %354 = sbr.rel target = $region64
                $region69: #{tpu_custom_call.1} parent=61 // loop_exit
                  _
                %s374 = sshrl.u32 %s292, 1
                %s375 = sand.u32 %s292, 1
                %s376 = smul.u32 %s374, 2
                %s377 = smul.u32 8, %s376
                %s378 = scalar_lea.vmem %s285, %s377 [#allocation2]
                %s379 = smul.u32 8, %s376
                %s380 = scalar_lea.vmem %s296, %s379
                // While loop
                $region70: #{tpu_custom_call.1} parent=61 // loop_pre_header
                  _
                $region71: #{tpu_custom_call.1} parent=61 // loop_header
                  %s382 = sphi 0, %s384
                  %p383 = scmp.ge.s32.totalorder %s382, %s375
                  %s387 = sphi 0, %s394
                  %s388 = sphi %s378, %s397
                  %s389 = sphi %s380, %s398
                $region72: #{tpu_custom_call.1} parent=61 // loop_header_branch
                  %386 = sbr.rel (%p383) target = $region76
                $region73: #{tpu_custom_call.1} parent=61 // loop_body
                  %v390 = vld [vmem:[%s388] sm:$0xff]
                  %391 = vst [vmem:[%s389] sm:$0xff] %v390
                  %s392 = sadd.s32 1, %s387
                  %p393 = scmp.ge.s32.totalorder %s392, %s375
                  %s394 = scalar_select %p393, 0, %s392
                  %s395 = smul.u32 %s394, 8
                  %s396 = smul.u32 %s394, 8
                  %s397 = scalar_lea.vmem %s378, %s395 [#allocation2]
                  %s398 = scalar_lea.vmem %s380, %s396
                $region74: #{tpu_custom_call.1} parent=61 // loop_footer
                  %s384 = sadd.s32 %s382, 1
                $region75: #{tpu_custom_call.1} parent=61 // loop_footer_branch
                  %381 = sbr.rel target = $region71
                $region76: #{tpu_custom_call.1} parent=61 // loop_exit
                  _
              $region62: #{tpu_custom_call.1} parent=39 // pred_fallthru
                _
              // Predicated region
              $region77: #{tpu_custom_call.1} parent=39 // pred_check
                _
              $region78: #{tpu_custom_call.1} parent=39 // pred_check_branch
                %400 = sbr.rel target = $region80
              $region79: #{tpu_custom_call.1} parent=39 // pred_region
                _
              $region80: #{tpu_custom_call.1} parent=39 // pred_fallthru
                _
            $region40: #{tpu_custom_call.1} parent=35 // pred_fallthru
              _
            // Predicated region
            $region41: #{tpu_custom_call.1} parent=35 // pred_check
              _
            $region42: #{tpu_custom_call.1} parent=35 // pred_check_branch
              %303 = sbr.rel target = $region44
            $region43: #{tpu_custom_call.1} parent=35 // pred_region
              %s305 = sshrl.u32 %s292, 1
              // While loop
              $region45: #{tpu_custom_call.1} parent=43 // loop_pre_header
                _
              $region46: #{tpu_custom_call.1} parent=43 // loop_header
                %s307 = sphi 0, %s309
                %p308 = scmp.ge.s32.totalorder %s307, %s305
                %s312 = sphi 0, %s321
                %s313 = sphi %s285, %s324
                %s314 = sphi %s296, %s325
              $region47: #{tpu_custom_call.1} parent=43 // loop_header_branch
                %311 = sbr.rel (%p308) target = $region51
              $region48: #{tpu_custom_call.1} parent=43 // loop_body
                %v315 = vld [vmem:[%s313] sm:$0xff]
                %316 = vst [vmem:[%s314] sm:$0xff] %v315
                %v317 = vld [vmem:[%s313 + $0x8] sm:$0xff]
                %318 = vst [vmem:[%s314 + $0x8] sm:$0xff] %v317
                %s319 = sadd.s32 1, %s312
                %p320 = scmp.ge.s32.totalorder %s319, %s305
                %s321 = scalar_select %p320, 0, %s319
                %s322 = smul.u32 %s321, 16
                %s323 = smul.u32 %s321, 16
                %s324 = scalar_lea.vmem %s285, %s322 [#allocation2]
                %s325 = scalar_lea.vmem %s296, %s323
              $region49: #{tpu_custom_call.1} parent=43 // loop_footer
                %s309 = sadd.s32 %s307, 1
              $region50: #{tpu_custom_call.1} parent=43 // loop_footer_branch
                %306 = sbr.rel target = $region46
              $region51: #{tpu_custom_call.1} parent=43 // loop_exit
                _
              %s326 = sshrl.u32 %s292, 1
              %s327 = sand.u32 %s292, 1
              %s328 = smul.u32 %s326, 2
              %s329 = smul.u32 8, %s328
              %s330 = scalar_lea.vmem %s285, %s329 [#allocation2]
              %s331 = smul.u32 8, %s328
              %s332 = scalar_lea.vmem %s296, %s331
              // While loop
              $region52: #{tpu_custom_call.1} parent=43 // loop_pre_header
                _
              $region53: #{tpu_custom_call.1} parent=43 // loop_header
                %s334 = sphi 0, %s336
                %p335 = scmp.ge.s32.totalorder %s334, %s327
                %s339 = sphi 0, %s346
                %s340 = sphi %s330, %s349
                %s341 = sphi %s332, %s350
              $region54: #{tpu_custom_call.1} parent=43 // loop_header_branch
                %338 = sbr.rel (%p335) target = $region58
              $region55: #{tpu_custom_call.1} parent=43 // loop_body
                %v342 = vld [vmem:[%s340] sm:$0xff]
                %343 = vst [vmem:[%s341] sm:$0xff] %v342
                %s344 = sadd.s32 1, %s339
                %p345 = scmp.ge.s32.totalorder %s344, %s327
                %s346 = scalar_select %p345, 0, %s344
                %s347 = smul.u32 %s346, 8
                %s348 = smul.u32 %s346, 8
                %s349 = scalar_lea.vmem %s330, %s347 [#allocation2]
                %s350 = scalar_lea.vmem %s332, %s348
              $region56: #{tpu_custom_call.1} parent=43 // loop_footer
                %s336 = sadd.s32 %s334, 1
              $region57: #{tpu_custom_call.1} parent=43 // loop_footer_branch
                %333 = sbr.rel target = $region53
              $region58: #{tpu_custom_call.1} parent=43 // loop_exit
                _
            $region44: #{tpu_custom_call.1} parent=35 // pred_fallthru
              _
          $region36: #{tpu_custom_call.1} parent=31 // pred_fallthru
            _
          %401 = vnop
        $region32: #{tpu_custom_call.1} parent=27 // pred_fallthru
          _
      $region28: #{tpu_custom_call.1} parent=5 // pred_fallthru
        _
      %p402 = scmp.le.s32.totalorder 2, %s8
      // Predicated region
      $region81: #{tpu_custom_call.1} parent=5 // pred_check
        %p403 = pneg %p402
      $region82: #{tpu_custom_call.1} parent=5 // pred_check_branch
        %405 = sbr.rel (%p403) target = $region84
      $region83: #{tpu_custom_call.1} parent=5 // pred_region
        %s406 = ssub.s32 %s8, 2
        // Predicated region
        $region85: #{tpu_custom_call.1} parent=83 // pred_check
          %p407 = pneg %p89
        $region86: #{tpu_custom_call.1} parent=83 // pred_check_branch
          %409 = sbr.rel (%p407) target = $region88
        $region87: #{tpu_custom_call.1} parent=83 // pred_region
          %s410 = sand.u32 %s74, 1
          %s411 = sand.u32 %s74, 1
          %s412 = smul.addr %s411, 16
          %s413 = scalar_lea.vmem [#allocation2], %s412
        $region88: #{tpu_custom_call.1} parent=83 // pred_fallthru
          _
      $region84: #{tpu_custom_call.1} parent=5 // pred_fallthru
        _
    $region6: #{tpu_custom_call.1} parent=1 // loop_footer
      %s12 = sadd.s32 1, %s8
    $region7: #{tpu_custom_call.1} parent=1 // loop_footer_branch
      %7 = sbr.rel target = $region3
    $region8: #{tpu_custom_call.1} parent=1 // loop_exit
      _

</llo_original>
